<compile_context>
chip_gen: v7x
topology: tpu7x:2x2x1
jax: 0.10.0
libtpu: 0.0.40
codegen_flags: <defaults>
</compile_context>

<pallas_src>
import jax
import jax.numpy as jnp
from jax.experimental import pallas as pl
from jax.experimental.pallas import tpu as pltpu


def _affine_kernel(p_ref, xt_ref, o_ref):
    # p_ref : (3,)      f32 in SMEM -> [w_eff0, w_eff1, b_eff]
    # xt_ref: (2, TILE) f32 in VMEM  (features on sublanes, batch on lanes)
    # o_ref : (1, TILE) f32 in VMEM  (lane-dense output)
    w0 = p_ref[0]
    w1 = p_ref[1]
    b = p_ref[2]
    x0 = xt_ref[0:1, :]          # (1, TILE)
    x1 = xt_ref[1:2, :]          # (1, TILE)
    o_ref[...] = x0 * w0 + x1 * w1 + b


def circle_model_v0(x, w1, b1, w2, b2, *, max_tile_lanes=65536):
    """Forward pass of CircleModelV0 (PyTorch parameter layout).

    x  : (N, 2) float32
    w1 : (5, 2), b1 : (5,)   -- torch layer_1.weight / layer_1.bias
    w2 : (1, 5), b2 : (1,)   -- torch layer_2.weight / layer_2.bias
    returns (N, 1) float32
    """
    x = jnp.asarray(x, jnp.float32)
    w1 = jnp.asarray(w1, jnp.float32)
    b1 = jnp.asarray(b1, jnp.float32)
    w2 = jnp.asarray(w2, jnp.float32)
    b2 = jnp.asarray(b2, jnp.float32)
    n = x.shape[0]

    # Fold the two linear layers (no nonlinearity between them) into one affine map.
    w_eff = (w2 @ w1).reshape(-1)             # (2,)
    b_eff = (w2 @ b1 + b2).reshape(-1)        # (1,)
    params = jnp.concatenate([w_eff, b_eff])  # (3,) -> SMEM

    # Lane-dense layout: batch on the lane (last) axis, padded to a multiple of
    # the tile size (itself a multiple of 128).
    n_ceil = max(128, ((n + 127) // 128) * 128)
    tile = min(max_tile_lanes, n_ceil)
    n_pad = ((n_ceil + tile - 1) // tile) * tile
    xt = jnp.pad(x.T, ((0, 0), (0, n_pad - n)))   # (2, n_pad)

    grid = (n_pad // tile,)

    out_t = pl.pallas_call(
        _affine_kernel,
        out_shape=jax.ShapeDtypeStruct((1, n_pad), jnp.float32),
        grid=grid,
        in_specs=[
            # Folded scalars: whole (3,) array, kept in SMEM.
            pl.BlockSpec(memory_space=pltpu.MemorySpace.SMEM),
            # Batch tile of the transposed input: (2, tile), lane-dense.
            pl.BlockSpec((2, tile), lambda i: (0, i)),
        ],
        out_specs=pl.BlockSpec((1, tile), lambda i: (0, i)),
        compiler_params=pltpu.CompilerParams(
            dimension_semantics=("parallel",),       # shard batch across v7x cores
            vmem_limit_bytes=32 * 1024 * 1024,       # explicit; safe on v5e/v6e/v7x
        ),
    )(params, xt)

    # Drop padding, return in the original (N, 1) torch layout.
    return out_t[0, :n].reshape(n, 1)


if __name__ == "__main__":
    key = jax.random.PRNGKey(0)
    kx, k1, k2, k3, k4 = jax.random.split(key, 5)

    N = 8
    x = jax.random.normal(kx, (N, 2), dtype=jnp.float32)

    # Deterministic parameter init (uniform, roughly like torch's default fan-in init).
    w1 = jax.random.uniform(k1, (5, 2), jnp.float32, -0.7, 0.7)    # layer_1.weight
    b1 = jax.random.uniform(k2, (5,), jnp.float32, -0.7, 0.7)      # layer_1.bias
    w2 = jax.random.uniform(k3, (1, 5), jnp.float32, -0.45, 0.45)  # layer_2.weight
    b2 = jax.random.uniform(k4, (1,), jnp.float32, -0.45, 0.45)    # layer_2.bias

    out = circle_model_v0(x, w1, b1, w2, b2)
    out = jax.block_until_ready(out)

    # Reference check in plain JAX (same math as the PyTorch forward).
    ref = (x @ w1.T + b1) @ w2.T + b2
    assert out.shape == (N, 1)
    assert jnp.allclose(out, ref, atol=1e-5), "mismatch vs reference"

    print("KERNEL_OK")
</pallas_src>

<mosaic_0001>
module attributes {stable_mosaic.version = 11 : i64} {
  func.func @_affine_kernel(%arg0: i32, %arg1: memref<3xf32, #tpu.memory_space<smem>>, %arg2: memref<2x128xf32, #tpu.memory_space<vmem>>, %arg3: memref<1x128xf32, #tpu.memory_space<vmem>>) attributes {dimension_semantics = [#tpu.dimension_semantics<parallel>], iteration_bounds = array<i64: 1>, scalar_prefetch = 0 : i64, scratch_operands = 0 : i64, tpu.core_type = #tpu.core_type<tc>, window_params = [{transform_indices = @transform_0, window_bounds = array<i64: 3>}, {transform_indices = @transform_1, window_bounds = array<i64: 2, 128>}, {transform_indices = @transform_2, window_bounds = array<i64: 1, 128>}]} {
    %c0 = arith.constant 0 : index
    %0 = memref.load %arg1[%c0] : memref<3xf32, #tpu.memory_space<smem>>
    %c1 = arith.constant 1 : index
    %1 = memref.load %arg1[%c1] : memref<3xf32, #tpu.memory_space<smem>>
    %c2 = arith.constant 2 : index
    %2 = memref.load %arg1[%c2] : memref<3xf32, #tpu.memory_space<smem>>
    %c0_0 = arith.constant 0 : index
    %c0_1 = arith.constant 0 : index
    %3 = vector.load %arg2[%c0_0, %c0_1] : memref<2x128xf32, #tpu.memory_space<vmem>>, vector<1x128xf32>
    %c1_2 = arith.constant 1 : index
    %c0_3 = arith.constant 0 : index
    %4 = vector.load %arg2[%c1_2, %c0_3] : memref<2x128xf32, #tpu.memory_space<vmem>>, vector<1x128xf32>
    %5 = vector.broadcast %0 : f32 to vector<1x128xf32>
    %6 = arith.mulf %3, %5 : vector<1x128xf32>
    %7 = vector.broadcast %1 : f32 to vector<1x128xf32>
    %8 = arith.mulf %4, %7 : vector<1x128xf32>
    %9 = arith.addf %6, %8 : vector<1x128xf32>
    %10 = vector.broadcast %2 : f32 to vector<1x128xf32>
    %11 = arith.addf %9, %10 : vector<1x128xf32>
    %c0_4 = arith.constant 0 : index
    %c0_5 = arith.constant 0 : index
    %12 = vector.load %arg3[%c0_4, %c0_5] : memref<1x128xf32, #tpu.memory_space<vmem>>, vector<1x128xf32>
    tpu.vector_store %arg3[%c0_4, %c0_5], %11 {strides = array<i32>} : memref<1x128xf32, #tpu.memory_space<vmem>>, vector<1x128xf32>,
    return
  }
  func.func @transform_0(%arg0: i32) -> i32 {
    %c0_i32 = arith.constant 0 : i32
    %c0_i32_0 = arith.constant 0 : i32
    return %c0_i32 : i32
  }
  func.func @transform_1(%arg0: i32) -> (i32, i32) {
    %c0_i32 = arith.constant 0 : i32
    %c0_i32_0 = arith.constant 0 : i32
    return %c0_i32, %arg0 : i32, i32
  }
  func.func @transform_2(%arg0: i32) -> (i32, i32) {
    %c0_i32 = arith.constant 0 : i32
    %c0_i32_0 = arith.constant 0 : i32
    return %c0_i32, %arg0 : i32, i32
  }
}

</mosaic_0001>

<llo_original>
// kernel: tpu_custom_call.1
$region0: #{tpu_custom_call.1}
  #allocation0 [shape = 'u32[]', space=smem, size = 0x4, offset = 0x4, fixed_abs, tag = 'smem constant byte address 0x4 - core index']
  #allocation1 [shape = 'u32[144,128]{1,0:T(1,128)}', space=vmem, size = 0x12000, scoped, tag = 'internal scratch']
  %s0 = inlined_call_operand.hbm [shape: f32[3], index: 0, kind: input, shape index: {}]
  %s1 = inlined_call_operand.vmem [shape: f32[2,128], index: 1, kind: input, shape index: {}]
  %s2 = inlined_call_operand.hbm [shape: f32[1,128], index: 2, kind: output, shape index: {}]
  %s3 = sld [smem:[#allocation0]]
  $region22: #{tpu_custom_call.1} parent=0
    _
  %s5 = ssub.s32 1, %s3
  %s6 = scalar_select 0, %s5, %s3
  $region1: #{tpu_custom_call.1} parent=0
    #allocation2 [shape = 'u8[512]{0}', space=smem, size = 0x200, scoped, tag = 'input window, operand 0, single buffered']
    #allocation3 [shape = 's32[1]{0}', space=sflag, size = 0x4, scoped, tag = 'scoped memory for tpu_custom_call.1']
    #allocation4 [shape = 's32[1]{0}', space=sflag, size = 0x4, scoped, tag = 'scoped memory for tpu_custom_call.1']
    #allocation5 [shape = 'u8[512]{0}', space=vmem, size = 0x400, scoped, tag = 'output window, operand 0, single buffered']
    %7 = vsyncpa [#allocation4], 0
    %8 = vsyncpa [#allocation3], 0
    // Predicated region
    $region2: #{tpu_custom_call.1} parent=1 // pred_check
      _
    $region3: #{tpu_custom_call.1} parent=1 // pred_check_branch
      %10 = sbr.rel (0) target = $region5
    $region4: #{tpu_custom_call.1} parent=1 // pred_region
      %s12 = ssub.s32 16, 16
      %13 = vsyncadd [#allocation4], %s12
      %16 = dma.hbm_to_smem %s0, 16, [#allocation2], [#allocation4]
    $region5: #{tpu_custom_call.1} parent=1 // pred_fallthru
      _
    // Predicated region
    $region6: #{tpu_custom_call.1} parent=1 // pred_check
      _
    $region7: #{tpu_custom_call.1} parent=1 // pred_check_branch
      %18 = sbr.rel (0) target = $region9
    $region8: #{tpu_custom_call.1} parent=1 // pred_region
      _
    $region9: #{tpu_custom_call.1} parent=1 // pred_fallthru
      _
    // Predicated region
    $region10: #{tpu_custom_call.1} parent=1 // pred_check
      _
    $region11: #{tpu_custom_call.1} parent=1 // pred_check_branch
      %20 = sbr.rel (0) target = $region13
    $region12: #{tpu_custom_call.1} parent=1 // pred_region
      %21 = dma.done [#allocation4], 16
    $region13: #{tpu_custom_call.1} parent=1 // pred_fallthru
      _
    %22 = sfence
    %s23 = sld [smem:[#allocation2]]
    %s24 = sld [smem:[#allocation2 + $0x1]]
    %s25 = sld [smem:[#allocation2 + $0x2]]
    %v26 = vld [vmem:[%s1] sm:$0x1]
    %v27 = vld [vmem:[%s1 + $0x1] sm:$0x1]
    %v28 = vstv %s23
    %v29 = vmul.f32 %v26, %v28
    %v30 = vstv %s24
    %v31 = vmul.f32 %v27, %v30
    %v32 = vadd.f32 %v29, %v31
    %v33 = vstv %s25
    %v34 = vadd.f32 %v32, %v33
    %35 = vst [vmem:[#allocation5] sm:$0x1] %v34
    // Predicated region
    $region14: #{tpu_custom_call.1} parent=1 // pred_check
      _
    $region15: #{tpu_custom_call.1} parent=1 // pred_check_branch
      %37 = sbr.rel (0) target = $region17
    $region16: #{tpu_custom_call.1} parent=1 // pred_region
      %s39 = ssub.s32 16, 16
      %40 = vsyncadd [#allocation3], %s39
      %s42 = sshll.u32 [#allocation5], 4
      %s43 = int_to_ptr.vmem [resolvable:$true] %s42
      %45 = dma.vmem_to_hbm [thread:$0]  %s43, 16, %s2, [#allocation3]
    $region17: #{tpu_custom_call.1} parent=1 // pred_fallthru
      _
    // Predicated region
    $region18: #{tpu_custom_call.1} parent=1 // pred_check
      _
    $region19: #{tpu_custom_call.1} parent=1 // pred_check_branch
      %47 = sbr.rel (0) target = $region21
    $region20: #{tpu_custom_call.1} parent=1 // pred_region
      %48 = dma.done [#allocation3], 16
    $region21: #{tpu_custom_call.1} parent=1 // pred_fallthru
      _
    %49 = vsyncpa [#allocation3], 1
    %50 = vsyncpa [#allocation4], 1

</llo_original>
